<compile_context>
chip_gen: v7x
topology: tpu7x:2x2x1
jax: 0.10.0
libtpu: 0.0.40
codegen_flags: <defaults>
</compile_context>

<pallas_src>
import jax
import jax.numpy as jnp
import numpy as np
from jax.experimental import pallas as pl
from jax.experimental.pallas import tpu as pltpu


# --------------------------------------------------------------------------- #
# Pallas kernel: one (node-row-tile, K-tile) grid step.
# --------------------------------------------------------------------------- #
def gclstm_kernel(xhl_ref, c_ref, w_ref, b_ref, wc_ref, hc_ref, acc_ref):
    # xhl_ref : (tm, tk)   K-slice of the fused input rows  [X | H | L_hat]   (matmul dtype)
    # c_ref   : (tm, Hd)   previous cell state                               (f32)
    # w_ref   : (tk, 4Hd)  K-slice of the fused weights     [Wx0; Wh0; T1]   (matmul dtype)
    # b_ref   : (1, 4Hd)   fused additive bias                               (f32)
    # wc_ref  : (1, 4Hd)   flattened peepholes [w_ci | w_cf | 0 | w_co]      (f32)
    # hc_ref  : (tm, 2Hd)  packed output [h_new | c_new]                     (f32)
    # acc_ref : (tm, 4Hd)  f32 VMEM accumulator for the K-tiled contraction
    k = pl.program_id(1)

    @pl.when(k == 0)
    def _():
        acc_ref[...] = jnp.zeros_like(acc_ref)

    # One fused MXU contraction per grid step (covers T0 term, hoisted Chebyshev-T1 term).
    acc_ref[...] += jnp.dot(xhl_ref[...], w_ref[...],
                            preferred_element_type=jnp.float32)

    @pl.when(k == pl.num_programs(1) - 1)
    def _():
        Hd = c_ref.shape[-1]
        c = c_ref[...]
        wc = wc_ref[...]
        z = acc_ref[...] + b_ref[...]                      # (tm, 4Hd), f32

        # Trimmed elementwise phase: only the transcendentals that are actually consumed.
        zi = z[:, 0 * Hd:1 * Hd]
        zf = z[:, 1 * Hd:2 * Hd]
        zc = z[:, 2 * Hd:3 * Hd]
        zo = z[:, 3 * Hd:4 * Hd]
        i_g = jax.nn.sigmoid(zi + wc[:, 0 * Hd:1 * Hd] * c)        # peephole on OLD cell
        f_g = jax.nn.sigmoid(zf + wc[:, 1 * Hd:2 * Hd] * c)        # peephole on OLD cell
        c_new = f_g * c + i_g * jnp.tanh(zc)
        o_g = jax.nn.sigmoid(zo + wc[:, 3 * Hd:4 * Hd] * c_new)    # peephole on NEW cell
        h_new = o_g * jnp.tanh(c_new)

        # Single packed store (lane-dense once Hd >= 64) instead of two Hd-wide vst.msk.
        hc_ref[...] = jnp.concatenate([h_new, c_new], axis=1)


# --------------------------------------------------------------------------- #
# Generation / tiling helpers.
# --------------------------------------------------------------------------- #
def _tpu_generation():
    """Best-effort (VMEM capacity, TensorCores-per-device) query with safe fallbacks."""
    vmem_cap = 64 << 20          # conservative default (v7x per-TC VMEM)
    n_tc = 1
    try:
        info = pltpu.get_tpu_info()
        vmem_cap = int(getattr(info, "vmem_capacity_bytes", vmem_cap))
    except Exception:
        pass
    try:
        kind = jax.devices()[0].device_kind.lower()
        if "v7" in kind or "tpu7" in kind:   # v7x exposes 2 TensorCores per device
            n_tc = 2
    except Exception:
        pass
    return vmem_cap, n_tc


def _step_bytes(tm, tk, Hd, itemsize):
    """VMEM consumed per grid step (double-buffered windows + scratch + tiny residents)."""
    G = 4 * Hd
    return (2 * tm * tk * itemsize          # [X|H|L] row window
            + 2 * tm * Hd * 4               # c window
            + 2 * tk * G * itemsize         # fused-weight K-slice window
            + 2 * tm * 2 * Hd * 4           # packed hc output window
            + tm * G * 4                    # f32 accumulator scratch
            + 4 * G * 4)                    # bias / peephole residents


def _vmem_limit_bytes(step_bytes, vmem_cap):
    want = int(1.5 * step_bytes) + (4 << 20)
    return int(min(max(want, 16 << 20), int(0.85 * vmem_cap)))


def _pick_tk(K_total, max_tk=2048):
    """K-tile for the fused contraction: a multiple of 128 dividing K_total (lane dim of
    the xhl block / sublane dim of the weight block), or the full extent."""
    if K_total <= max_tk or K_total % 128 != 0:
        return K_total
    best = K_total
    for d in range(128, max_tk + 1, 128):
        if K_total % d == 0:
            best = d
    return best


def _pick_tm(N, tk, Hd, itemsize, budget_bytes, n_tc, cap=256):
    """Largest row-tile that divides N, fits the per-step VMEM budget, stays under a
    vreg-pressure cap for the gate phase, and — only on multi-TensorCore chips — keeps
    >= n_tc grid steps so the 'parallel' node axis shards across cores."""
    # TODO(synk): instead of the hard `cap`, chunk the gate phase over sublane sub-tiles
    # with lax.fori_loop(..., unroll=True) so very large tm doesn't spill vregs.
    cands = [t for t in range(8, min(N, cap) + 1, 8) if N % t == 0] or [N]
    fit = [t for t in cands if _step_bytes(t, tk, Hd, itemsize) <= budget_bytes] \
        or [cands[0]]
    if n_tc >= 2:
        multi = [t for t in fit if N // t >= n_tc]
        if multi:
            return max(multi)
    return max(fit)


# --------------------------------------------------------------------------- #
# Wrapper: hoisted T1 multiply, operand fusion, BlockSpecs / grid setup.
# --------------------------------------------------------------------------- #
def gclstm_forward(x, l_hat, h, c, params, *, tm=None, tk=None,
                   matmul_dtype=jnp.bfloat16):
    N, F = x.shape
    Hd = h.shape[1]
    G = 4 * Hd
    md = jnp.dtype(matmul_dtype)
    c = c.astype(jnp.float32)

    # ---- hoisted once per call (plain JAX glue) ------------------------------
    xh = jnp.concatenate([x, h], axis=1).astype(md)                   # (N, F+Hd)
    w1 = jnp.concatenate([params["wx1"], params["wh1"]], axis=0).astype(md)
    # Chebyshev-T1 term, produced directly in the matmul dtype (f32 accumulate).
    t1 = jnp.dot(xh, w1, preferred_element_type=jnp.float32).astype(md)   # (N, 4Hd)
    # Fused operands for ONE MXU contraction:  z = [X|H|L_hat] @ [Wx0;Wh0;T1] + b
    xhl = jnp.concatenate([xh, l_hat.astype(md)], axis=1)             # (N, F+Hd+N)
    wfull = jnp.concatenate([params["wx0"].astype(md),
                             params["wh0"].astype(md), t1], axis=0)   # (F+Hd+N, 4Hd)
    b = params["b"].astype(jnp.float32)                               # (1, 4Hd)
    wc_flat = params["wc"].reshape(1, G).astype(jnp.float32)          # [w_ci|w_cf|0|w_co]

    K_total = F + Hd + N
    vmem_cap, n_tc = _tpu_generation()
    if tk is None:
        tk = _pick_tk(K_total)
    assert K_total % tk == 0, f"tk={tk} must divide K_total={K_total}"
    if tm is None:
        budget = max((vmem_cap // 2) - (1 << 20), 4 << 20)
        tm = _pick_tm(N, tk, Hd, md.itemsize, budget, n_tc)
    assert N % tm == 0, f"tm={tm} must divide N={N}"

    step_bytes = _step_bytes(tm, tk, Hd, md.itemsize)

    # TODO(synk): for real (large, sparse) graphs, replace the dense L_hat columns with a
    # block-sparse / scalar-prefetch gathered layout so HBM traffic is O(E), not O(N^2).
    # TODO(synk): when driven inside a time loop, alias the cell-state buffer instead of
    # re-allocating (needs unpacked c_new output to use input_output_aliases).
    hc = pl.pallas_call(
        gclstm_kernel,
        grid=(N // tm, K_total // tk),
        in_specs=[pl.BlockSpec((tm, tk), lambda i, k: (i, k)),        # fused rows
                  pl.BlockSpec((tm, Hd), lambda i, k: (i, 0)),        # prev cell
                  pl.BlockSpec((tk, G), lambda i, k: (k, 0)),         # fused weights
                  pl.BlockSpec((1, G), lambda i, k: (0, 0)),          # bias
                  pl.BlockSpec((1, G), lambda i, k: (0, 0))],         # peepholes
        out_specs=pl.BlockSpec((tm, 2 * Hd), lambda i, k: (i, 0)),    # packed [h|c]
        out_shape=jax.ShapeDtypeStruct((N, 2 * Hd), jnp.float32),
        scratch_shapes=[pltpu.VMEM((tm, G), jnp.float32)],
        compiler_params=pltpu.CompilerParams(
            dimension_semantics=("parallel", "arbitrary"),
            vmem_limit_bytes=_vmem_limit_bytes(step_bytes, vmem_cap)),
    )(xhl, c, wfull, b, wc_flat)

    h_new = hc[:, :Hd]
    c_new = hc[:, Hd:]
    # Head (hidden -> 1) stays in XLA: a width-1 in-kernel store would be a lane-sparse
    # masked vst and waste a whole MXU pass for one useful output column.
    y = jnp.dot(h_new, params["whead"],
                preferred_element_type=jnp.float32) + params["bhead"]
    return y, h_new, c_new


# --------------------------------------------------------------------------- #
# Glue: dense scaled Laplacian + deterministic parameter init + reference.
# --------------------------------------------------------------------------- #
def scaled_laplacian(edge_index, edge_weight, num_nodes):
    # NOTE: degree is accumulated at `src` only, which matches PyG "sym" normalization
    # only for symmetric edge lists with matching reciprocal weights (true for the demo
    # ring). The sparse scatter stays in plain JAX glue; the dense propagate L_hat @ [X|H]
    # is what runs on the MXU inside the Pallas kernel.
    src, dst = edge_index[0], edge_index[1]
    deg = jnp.zeros((num_nodes,), jnp.float32).at[src].add(edge_weight)
    dinv = jnp.where(deg > 0, jax.lax.rsqrt(deg), 0.0)
    vals = -dinv[src] * edge_weight * dinv[dst]
    # lambda_max = 2.0 (sym default) => L_hat = (2/l)*(I - D^-1/2 A D^-1/2) - I
    #                                         = -D^-1/2 A D^-1/2
    return jnp.zeros((num_nodes, num_nodes), jnp.float32).at[dst, src].add(vals)


def init_params(key, in_dim, hidden):
    keys = jax.random.split(key, 24)

    def glorot(k, shape):
        s = jnp.sqrt(6.0 / (shape[0] + shape[1]))
        return jax.random.uniform(k, shape, jnp.float32, -s, s)

    # ChebConv weights, K=2, gate order [i, f, c, o], concatenated along out dim.
    wx0 = jnp.concatenate([glorot(keys[g],      (in_dim, hidden)) for g in range(4)], axis=1)
    wx1 = jnp.concatenate([glorot(keys[4 + g],  (in_dim, hidden)) for g in range(4)], axis=1)
    wh0 = jnp.concatenate([glorot(keys[8 + g],  (hidden, hidden)) for g in range(4)], axis=1)
    wh1 = jnp.concatenate([glorot(keys[12 + g], (hidden, hidden)) for g in range(4)], axis=1)
    # Additive biases (ChebConv_x bias + ChebConv_h bias + gate bias) folded into one.
    b = 0.05 * jax.random.normal(keys[16], (1, 4 * hidden), jnp.float32)
    # Peephole weights w_c_{i,f,o}; row 2 (cell candidate) has no peephole -> zeros.
    wc = 0.1 * jax.random.normal(keys[17], (4, hidden), jnp.float32)
    wc = wc.at[2, :].set(0.0)
    # Head: nn.Linear(hidden, 1)
    whead = glorot(keys[18], (hidden, 1))
    bhead = 0.05 * jax.random.normal(keys[19], (1, 1), jnp.float32)
    return dict(wx0=wx0, wx1=wx1, wh0=wh0, wh1=wh1, b=b, wc=wc,
                whead=whead, bhead=bhead)


def reference(x, l_hat, h, c, p):
    Hd = h.shape[1]
    lx = l_hat @ x
    lh = l_hat @ h
    z = x @ p["wx0"] + lx @ p["wx1"] + h @ p["wh0"] + lh @ p["wh1"] + p["b"]
    zi, zf, zc, zo = (z[:, k * Hd:(k + 1) * Hd] for k in range(4))
    i_g = jax.nn.sigmoid(zi + p["wc"][0:1] * c)
    f_g = jax.nn.sigmoid(zf + p["wc"][1:2] * c)
    c_new = f_g * c + i_g * jnp.tanh(zc)
    o_g = jax.nn.sigmoid(zo + p["wc"][3:4] * c_new)
    h_new = o_g * jnp.tanh(c_new)
    y = h_new @ p["whead"] + p["bhead"]
    return y, h_new, c_new


if __name__ == "__main__":
    N, IN_DIM, HIDDEN = 64, 8, 32          # 4*HIDDEN = 128 -> lane-dense gate block

    key = jax.random.PRNGKey(0)
    k_x, k_h, k_c, k_w, k_p = jax.random.split(key, 5)

    # Node features and previous hidden / cell states.
    x = jax.random.normal(k_x, (N, IN_DIM), jnp.float32)
    h = 0.5 * jax.random.normal(k_h, (N, HIDDEN), jnp.float32)
    c = 0.5 * jax.random.normal(k_c, (N, HIDDEN), jnp.float32)

    # Undirected ring graph: edges (i, i+1) and (i+1, i), symmetric positive weights.
    src = np.concatenate([np.arange(N), (np.arange(N) + 1) % N])
    dst = np.concatenate([(np.arange(N) + 1) % N, np.arange(N)])
    edge_index = jnp.asarray(np.stack([src, dst]), jnp.int32)        # (2, E)
    w_half = 0.5 + jax.random.uniform(k_w, (N,), jnp.float32)
    edge_weight = jnp.concatenate([w_half, w_half])                  # reciprocal weights match

    l_hat = scaled_laplacian(edge_index, edge_weight, N)
    params = init_params(k_p, IN_DIM, HIDDEN)

    y_r, h_r, c_r = reference(x, l_hat, h, c, params)

    # f32 matmul path: tight check against the independent gate-by-gate reference.
    y, h_new, c_new = gclstm_forward(x, l_hat, h, c, params, matmul_dtype=jnp.float32)
    jax.block_until_ready((y, h_new, c_new))
    np.testing.assert_allclose(np.asarray(y), np.asarray(y_r), rtol=2e-3, atol=2e-3)
    np.testing.assert_allclose(np.asarray(h_new), np.asarray(h_r), rtol=2e-3, atol=2e-3)
    np.testing.assert_allclose(np.asarray(c_new), np.asarray(c_r), rtol=2e-3, atol=2e-3)

    # Default bf16 matmul inputs (native MXU path), f32 accumulation + f32 gate math.
    # Loose tolerance only budgets the bf16 input rounding vs the f32 reference.
    y_b, h_b, c_b = gclstm_forward(x, l_hat, h, c, params)
    jax.block_until_ready((y_b, h_b, c_b))
    np.testing.assert_allclose(np.asarray(h_b), np.asarray(h_r), rtol=1e-1, atol=1e-1)
    np.testing.assert_allclose(np.asarray(c_b), np.asarray(c_r), rtol=1e-1, atol=1e-1)

    print("KERNEL_OK")
</pallas_src>

<mosaic_0001>
module attributes {stable_mosaic.version = 11 : i64} {
  func.func @gclstm_kernel(%arg0: i32, %arg1: i32, %arg2: memref<64x104xf32, #tpu.memory_space<vmem>>, %arg3: memref<64x32xf32, #tpu.memory_space<vmem>>, %arg4: memref<104x128xf32, #tpu.memory_space<vmem>>, %arg5: memref<1x128xf32, #tpu.memory_space<vmem>>, %arg6: memref<1x128xf32, #tpu.memory_space<vmem>>, %arg7: memref<64x64xf32, #tpu.memory_space<vmem>>, %arg8: memref<64x128xf32, #tpu.memory_space<vmem>>) attributes {dimension_semantics = [#tpu.dimension_semantics<parallel>, #tpu.dimension_semantics<arbitrary>], iteration_bounds = array<i64: 1, 1>, scalar_prefetch = 0 : i64, scratch_operands = 1 : i64, tpu.core_type = #tpu.core_type<tc>, window_params = [{transform_indices = @transform_0, window_bounds = array<i64: 64, 104>}, {transform_indices = @transform_1, window_bounds = array<i64: 64, 32>}, {transform_indices = @transform_2, window_bounds = array<i64: 104, 128>}, {pipeline_mode = #tpu.pipeline_mode<synchronous>, transform_indices = @transform_3, window_bounds = array<i64: 1, 128>}, {pipeline_mode = #tpu.pipeline_mode<synchronous>, transform_indices = @transform_4, window_bounds = array<i64: 1, 128>}, {transform_indices = @transform_5, window_bounds = array<i64: 64, 64>}]} {
    %c0_i32 = arith.constant 0 : i32
    %0 = arith.cmpi eq, %arg1, %c0_i32 : i32
    %1 = arith.extui %0 : i1 to i32
    %c0_i32_0 = arith.constant 0 : i32
    %2 = arith.cmpi ne, %1, %c0_i32_0 : i32
    scf.if %2 {
      %cst_10 = arith.constant 0.000000e+00 : f32
      %12 = vector.broadcast %cst_10 : f32 to vector<64x128xf32>
      %c0_11 = arith.constant 0 : index
      %c0_12 = arith.constant 0 : index
      %13 = vector.load %arg8[%c0_11, %c0_12] : memref<64x128xf32, #tpu.memory_space<vmem>>, vector<64x128xf32>
      tpu.vector_store %arg8[%c0_11, %c0_12], %12 {strides = array<i32>} : memref<64x128xf32, #tpu.memory_space<vmem>>, vector<64x128xf32>,
    } else {
    }
    %c0 = arith.constant 0 : index
    %c0_1 = arith.constant 0 : index
    %3 = vector.load %arg8[%c0, %c0_1] : memref<64x128xf32, #tpu.memory_space<vmem>>, vector<64x128xf32>
    %c0_2 = arith.constant 0 : index
    %c0_3 = arith.constant 0 : index
    %4 = vector.load %arg2[%c0_2, %c0_3] : memref<64x104xf32, #tpu.memory_space<vmem>>, vector<64x104xf32>
    %c0_4 = arith.constant 0 : index
    %c0_5 = arith.constant 0 : index
    %5 = vector.load %arg4[%c0_4, %c0_5] : memref<104x128xf32, #tpu.memory_space<vmem>>, vector<104x128xf32>
    %cst = arith.constant dense<0.000000e+00> : vector<64x128xf32>
    %6 = tpu.matmul %4, %5, %cst {dimension_numbers = #tpu.dot_dimension_numbers<[1], [0], [0], [1], [0, 0, 1, 1], [], []>} : vector<64x104xf32>, vector<104x128xf32>, vector<64x128xf32> -> vector<64x128xf32>
    %7 = arith.addf %3, %6 : vector<64x128xf32>
    %c0_6 = arith.constant 0 : index
    %c0_7 = arith.constant 0 : index
    %8 = vector.load %arg8[%c0_6, %c0_7] : memref<64x128xf32, #tpu.memory_space<vmem>>, vector<64x128xf32>
    tpu.vector_store %arg8[%c0_6, %c0_7], %7 {strides = array<i32>} : memref<64x128xf32, #tpu.memory_space<vmem>>, vector<64x128xf32>,
    %c0_i32_8 = arith.constant 0 : i32
    %9 = arith.cmpi eq, %arg1, %c0_i32_8 : i32
    %10 = arith.extui %9 : i1 to i32
    %c0_i32_9 = arith.constant 0 : i32
    %11 = arith.cmpi ne, %10, %c0_i32_9 : i32
    scf.if %11 {
      %c0_10 = arith.constant 0 : index
      %c0_11 = arith.constant 0 : index
      %12 = vector.load %arg3[%c0_10, %c0_11] : memref<64x32xf32, #tpu.memory_space<vmem>>, vector<64x32xf32>
      %c0_12 = arith.constant 0 : index
      %c0_13 = arith.constant 0 : index
      %13 = vector.load %arg6[%c0_12, %c0_13] : memref<1x128xf32, #tpu.memory_space<vmem>>, vector<1x128xf32>
      %c0_14 = arith.constant 0 : index
      %c0_15 = arith.constant 0 : index
      %14 = vector.load %arg8[%c0_14, %c0_15] : memref<64x128xf32, #tpu.memory_space<vmem>>, vector<64x128xf32>
      %c0_16 = arith.constant 0 : index
      %c0_17 = arith.constant 0 : index
      %15 = vector.load %arg5[%c0_16, %c0_17] : memref<1x128xf32, #tpu.memory_space<vmem>>, vector<1x128xf32>
      %16 = vector.broadcast %15 : vector<1x128xf32> to vector<64x128xf32>
      %17 = arith.addf %14, %16 : vector<64x128xf32>
      %18 = vector.extract_strided_slice %17 {offsets = [0, 0], sizes = [64, 32], strides = [1, 1]} : vector<64x128xf32> to vector<64x32xf32>
      %19 = vector.extract_strided_slice %17 {offsets = [0, 32], sizes = [64, 32], strides = [1, 1]} : vector<64x128xf32> to vector<64x32xf32>
      %20 = vector.extract_strided_slice %17 {offsets = [0, 64], sizes = [64, 32], strides = [1, 1]} : vector<64x128xf32> to vector<64x32xf32>
      %21 = vector.extract_strided_slice %17 {offsets = [0, 96], sizes = [64, 32], strides = [1, 1]} : vector<64x128xf32> to vector<64x32xf32>
      %22 = vector.extract_strided_slice %13 {offsets = [0, 0], sizes = [1, 32], strides = [1, 1]} : vector<1x128xf32> to vector<1x32xf32>
      %23 = vector.broadcast %22 : vector<1x32xf32> to vector<64x32xf32>
      %24 = arith.mulf %23, %12 : vector<64x32xf32>
      %25 = arith.addf %18, %24 : vector<64x32xf32>
      %26 = arith.negf %25 : vector<64x32xf32>
      %27 = math.exp %26 : vector<64x32xf32>
      %cst_18 = arith.constant 1.000000e+00 : f32
      %28 = vector.broadcast %cst_18 : f32 to vector<64x32xf32>
      %29 = arith.addf %28, %27 : vector<64x32xf32>
      %30 = arith.divf %28, %29 : vector<64x32xf32>
      %31 = vector.extract_strided_slice %13 {offsets = [0, 32], sizes = [1, 32], strides = [1, 1]} : vector<1x128xf32> to vector<1x32xf32>
      %32 = vector.broadcast %31 : vector<1x32xf32> to vector<64x32xf32>
      %33 = arith.mulf %32, %12 : vector<64x32xf32>
      %34 = arith.addf %19, %33 : vector<64x32xf32>
      %35 = arith.negf %34 : vector<64x32xf32>
      %36 = math.exp %35 : vector<64x32xf32>
      %cst_19 = arith.constant 1.000000e+00 : f32
      %37 = vector.broadcast %cst_19 : f32 to vector<64x32xf32>
      %38 = arith.addf %37, %36 : vector<64x32xf32>
      %39 = arith.divf %37, %38 : vector<64x32xf32>
      %40 = arith.mulf %39, %12 : vector<64x32xf32>
      %41 = math.tanh %20 : vector<64x32xf32>
      %42 = arith.mulf %30, %41 : vector<64x32xf32>
      %43 = arith.addf %40, %42 : vector<64x32xf32>
      %44 = vector.extract_strided_slice %13 {offsets = [0, 96], sizes = [1, 32], strides = [1, 1]} : vector<1x128xf32> to vector<1x32xf32>
      %45 = vector.broadcast %44 : vector<1x32xf32> to vector<64x32xf32>
      %46 = arith.mulf %45, %43 : vector<64x32xf32>
      %47 = arith.addf %21, %46 : vector<64x32xf32>
      %48 = arith.negf %47 : vector<64x32xf32>
      %49 = math.exp %48 : vector<64x32xf32>
      %cst_20 = arith.constant 1.000000e+00 : f32
      %50 = vector.broadcast %cst_20 : f32 to vector<64x32xf32>
      %51 = arith.addf %50, %49 : vector<64x32xf32>
      %52 = arith.divf %50, %51 : vector<64x32xf32>
      %53 = math.tanh %43 : vector<64x32xf32>
      %54 = arith.mulf %52, %53 : vector<64x32xf32>
      %55 = tpu.concatenate %54, %43 in 1 : vector<64x32xf32>, vector<64x32xf32> -> vector<64x64xf32>
      %c0_21 = arith.constant 0 : index
      %c0_22 = arith.constant 0 : index
      %56 = vector.load %arg7[%c0_21, %c0_22] : memref<64x64xf32, #tpu.memory_space<vmem>>, vector<64x64xf32>
      tpu.vector_store %arg7[%c0_21, %c0_22], %55 {strides = array<i32>} : memref<64x64xf32, #tpu.memory_space<vmem>>, vector<64x64xf32>,
    } else {
    }
    return
  }
  func.func @transform_0(%arg0: i32, %arg1: i32) -> (i32, i32) {
    %c0_i32 = arith.constant 0 : i32
    return %arg0, %arg1 : i32, i32
  }
  func.func @transform_1(%arg0: i32, %arg1: i32) -> (i32, i32) {
    %c0_i32 = arith.constant 0 : i32
    %c0_i32_0 = arith.constant 0 : i32
    return %arg0, %c0_i32 : i32, i32
  }
  func.func @transform_2(%arg0: i32, %arg1: i32) -> (i32, i32) {
    %c0_i32 = arith.constant 0 : i32
    %c0_i32_0 = arith.constant 0 : i32
    return %arg1, %c0_i32 : i32, i32
  }
  func.func @transform_3(%arg0: i32, %arg1: i32) -> (i32, i32) {
    %c0_i32 = arith.constant 0 : i32
    %c0_i32_0 = arith.constant 0 : i32
    %c0_i32_1 = arith.constant 0 : i32
    return %c0_i32, %c0_i32_0 : i32, i32
  }
  func.func @transform_4(%arg0: i32, %arg1: i32) -> (i32, i32) {
    %c0_i32 = arith.constant 0 : i32
    %c0_i32_0 = arith.constant 0 : i32
    %c0_i32_1 = arith.constant 0 : i32
    return %c0_i32, %c0_i32_0 : i32, i32
  }
  func.func @transform_5(%arg0: i32, %arg1: i32) -> (i32, i32) {
    %c0_i32 = arith.constant 0 : i32
    %c0_i32_0 = arith.constant 0 : i32
    return %arg0, %c0_i32 : i32, i32
  }
}

</mosaic_0001>

<llo_original>
// kernel: tpu_custom_call.1
$region0: #{tpu_custom_call.1}
  #allocation0 [shape = 'u32[]', space=smem, size = 0x4, offset = 0x4, fixed_abs, tag = 'smem constant byte address 0x4 - core index']
  #allocation1 [shape = 'u32[144,128]{1,0:T(1,128)}', space=vmem, size = 0x12000, scoped, tag = 'internal scratch']
  #allocation2 [shape = 'f32[64,128]{1,0:T(8,128)}', space=vmem, size = 0x8000, scoped, tag = 'scratch operand']
  %s0 = inlined_call_operand.vmem [shape: f32[64,104], index: 0, kind: input, shape index: {}]
  %s1 = inlined_call_operand.vmem [shape: f32[64,32], index: 1, kind: input, shape index: {}]
  %s2 = inlined_call_operand.hbm [shape: f32[104,128], index: 2, kind: input, shape index: {}]
  %s3 = inlined_call_operand.vmem [shape: f32[1,128], index: 3, kind: input, shape index: {}]
  %s4 = inlined_call_operand.vmem [shape: f32[1,128], index: 4, kind: input, shape index: {}]
  %s5 = inlined_call_operand.hbm [shape: f32[64,64], index: 5, kind: output, shape index: {}]
  %s6 = sld [smem:[#allocation0]]
  $region42: #{tpu_custom_call.1} parent=0
    _
  %s8 = ssub.s32 1, %s6
  %s9 = scalar_select 0, %s8, %s6
  $region1: #{tpu_custom_call.1} parent=0
    #allocation3 [shape = 'u8[53248]{0}', space=vmem, size = 0xd000, scoped, tag = 'input window, operand 2, single buffered']
    #allocation4 [shape = 's32[1]{0}', space=sflag, size = 0x4, scoped, tag = 'scoped memory for tpu_custom_call.1']
    #allocation5 [shape = 's32[1]{0}', space=sflag, size = 0x4, scoped, tag = 'scoped memory for tpu_custom_call.1']
    #allocation6 [shape = 'u8[32768]{0}', space=vmem, size = 0x8000, scoped, tag = 'output window, operand 0, single buffered']
    %10 = vsyncpa [#allocation4], 0
    %11 = vsyncpa [#allocation5], 0
    // Predicated region
    $region2: #{tpu_custom_call.1} parent=1 // pred_check
      _
    $region3: #{tpu_custom_call.1} parent=1 // pred_check_branch
      %13 = sbr.rel (0) target = $region5
    $region4: #{tpu_custom_call.1} parent=1 // pred_region
      _
    $region5: #{tpu_custom_call.1} parent=1 // pred_fallthru
      _
    // Predicated region
    $region6: #{tpu_custom_call.1} parent=1 // pred_check
      _
    $region7: #{tpu_custom_call.1} parent=1 // pred_check_branch
      %15 = sbr.rel (0) target = $region9
    $region8: #{tpu_custom_call.1} parent=1 // pred_region
      _
    $region9: #{tpu_custom_call.1} parent=1 // pred_fallthru
      _
    // Predicated region
    $region10: #{tpu_custom_call.1} parent=1 // pred_check
      _
    $region11: #{tpu_custom_call.1} parent=1 // pred_check_branch
      %17 = sbr.rel (0) target = $region13
    $region12: #{tpu_custom_call.1} parent=1 // pred_region
      %s19 = ssub.s32 1664, 1664
      %20 = vsyncadd [#allocation4], %s19
      %s21 = sshll.u32 [#allocation3], 4
      %s22 = int_to_ptr.vmem [resolvable:$true] %s21
      %27 = dma.hbm_to_vmem [thread:$0]  %s2, 1664, %s22, [#allocation4], 128, 128, 8
    $region13: #{tpu_custom_call.1} parent=1 // pred_fallthru
      _
    // Predicated region
    $region14: #{tpu_custom_call.1} parent=1 // pred_check
      _
    $region15: #{tpu_custom_call.1} parent=1 // pred_check_branch
      %29 = sbr.rel (0) target = $region17
    $region16: #{tpu_custom_call.1} parent=1 // pred_region
      _
    $region17: #{tpu_custom_call.1} parent=1 // pred_fallthru
      _
    // Predicated region
    $region18: #{tpu_custom_call.1} parent=1 // pred_check
      _
    $region19: #{tpu_custom_call.1} parent=1 // pred_check_branch
      %31 = sbr.rel (0) target = $region21
    $region20: #{tpu_custom_call.1} parent=1 // pred_region
      _
    $region21: #{tpu_custom_call.1} parent=1 // pred_fallthru
      _
    // Predicated region
    $region22: #{tpu_custom_call.1} parent=1 // pred_check
      _
    $region23: #{tpu_custom_call.1} parent=1 // pred_check_branch
      %33 = sbr.rel (0) target = $region25
    $region24: #{tpu_custom_call.1} parent=1 // pred_region
      %34 = dma.done [#allocation4], 1664
    $region25: #{tpu_custom_call.1} parent=1 // pred_fallthru
      _
    %p35 = scmp.eq.s32.totalorder 0, 0
    // Predicated region
    $region26: #{tpu_custom_call.1} parent=1 // pred_check
      %p36 = pneg %p35
    $region27: #{tpu_custom_call.1} parent=1 // pred_check_branch
      %38 = sbr.rel (%p36) target = $region29
    $region28: #{tpu_custom_call.1} parent=1 // pred_region
      %39 = vst [vmem:[#allocation2] sm:$0xff] 0.0
      %40 = vst [vmem:[#allocation2 + $0x8] sm:$0xff] 0.0
      %41 = vst [vmem:[#allocation2 + $0x10] sm:$0xff] 0.0
      %42 = vst [vmem:[#allocation2 + $0x18] sm:$0xff] 0.0
      %43 = vst [vmem:[#allocation2 + $0x20] sm:$0xff] 0.0
      %44 = vst [vmem:[#allocation2 + $0x28] sm:$0xff] 0.0
      %45 = vst [vmem:[#allocation2 + $0x30] sm:$0xff] 0.0
      %46 = vst [vmem:[#allocation2 + $0x38] sm:$0xff] 0.0
    $region29: #{tpu_custom_call.1} parent=1 // pred_fallthru
      _
    %v47 = vld [vmem:[#allocation2] sm:$0xff]
    %v48 = vld [vmem:[#allocation2 + $0x8] sm:$0xff]
    %v49 = vld [vmem:[#allocation2 + $0x10] sm:$0xff]
    %v50 = vld [vmem:[#allocation2 + $0x18] sm:$0xff]
    %v51 = vld [vmem:[#allocation2 + $0x20] sm:$0xff]
    %v52 = vld [vmem:[#allocation2 + $0x28] sm:$0xff]
    %v53 = vld [vmem:[#allocation2 + $0x30] sm:$0xff]
    %v54 = vld [vmem:[#allocation2 + $0x38] sm:$0xff]
    %v55 = vld [vmem:[%s0] sm:$0xff]
    %v56 = vld [vmem:[%s0 + $0x8] sm:$0xff]
    %v57 = vld [vmem:[%s0 + $0x10] sm:$0xff]
    %v58 = vld [vmem:[%s0 + $0x18] sm:$0xff]
    %v59 = vld [vmem:[%s0 + $0x20] sm:$0xff]
    %v60 = vld [vmem:[%s0 + $0x28] sm:$0xff]
    %v61 = vld [vmem:[%s0 + $0x30] sm:$0xff]
    %v62 = vld [vmem:[%s0 + $0x38] sm:$0xff]
    %v63 = vld [vmem:[#allocation3] sm:$0xff]
    %v64 = vld [vmem:[#allocation3 + $0x8] sm:$0xff]
    %v65 = vld [vmem:[#allocation3 + $0x10] sm:$0xff]
    %v66 = vld [vmem:[#allocation3 + $0x18] sm:$0xff]
    %v67 = vld [vmem:[#allocation3 + $0x20] sm:$0xff]
    %v68 = vld [vmem:[#allocation3 + $0x28] sm:$0xff]
    %v69 = vld [vmem:[#allocation3 + $0x30] sm:$0xff]
    %v70 = vld [vmem:[#allocation3 + $0x38] sm:$0xff]
    %v71 = vld [vmem:[#allocation3 + $0x40] sm:$0xff]
    %v72 = vld [vmem:[#allocation3 + $0x48] sm:$0xff]
    %v73 = vld [vmem:[#allocation3 + $0x50] sm:$0xff]
    %v74 = vld [vmem:[#allocation3 + $0x58] sm:$0xff]
    %v75 = vld [vmem:[#allocation3 + $0x60] sm:$0xff]
    %vm76 = vcmask 850944
    %v78 = vsel %vm76, %v55, 0
    %v81 = vsel %vm76, %v56, 0
    %v84 = vsel %vm76, %v57, 0
    %v87 = vsel %vm76, %v58, 0
    %v90 = vsel %vm76, %v59, 0
    %v93 = vsel %vm76, %v60, 0
    %v96 = vsel %vm76, %v61, 0
    %v99 = vsel %vm76, %v62, 0
    %101 = vmatprep.subr.mxu0 0.0
    %102 = vmatpush1.msra.mxu0 %v63
    %103 = vmatprep.subr.mxu0 0.0
    %104 = vmatpush1.msra.mxu0 %v64
    %105 = vmatprep.subr.mxu0 0.0
    %106 = vmatpush1.msra.mxu0 %v65
    %107 = vmatprep.subr.mxu0 0.0
    %108 = vmatpush1.msra.mxu0 %v66
    %109 = vmatprep.subr.mxu0 0.0
    %110 = vmatpush1.msra.mxu0 %v67
    %111 = vmatprep.subr.mxu0 0.0
    %112 = vmatpush1.msra.mxu0 %v68
    %113 = vmatprep.subr.mxu0 0.0
    %114 = vmatpush1.msra.mxu0 %v69
    %115 = vmatprep.subr.mxu0 0.0
    %116 = vmatpush1.msra.mxu0 %v70
    %117 = vmatprep.subr.mxu0 0.0
    %118 = vmatpush1.msra.mxu0 %v71
    %119 = vmatprep.subr.mxu0 0.0
    %120 = vmatpush1.msra.mxu0 %v72
    %121 = vmatprep.subr.mxu0 0.0
    %122 = vmatpush1.msra.mxu0 %v73
    %123 = vmatprep.subr.mxu0 0.0
    %124 = vmatpush1.msra.mxu0 %v74
    %125 = vmatprep.subr.mxu0 0.0
    %126 = vmatpush1.msra.mxu0 %v75
    %127 = vmatprep.subr.mxu0 0.0
    %128 = vmatpush1.msra.mxu0 0.0
    %129 = vmatprep.subr.mxu0 0.0
    %130 = vmatpush1.msra.mxu0 0.0
    %131 = vmatprep.subr.mxu0 0.0
    %132 = vmatpush1.msra.mxu0 0.0
    %133 = vmatprep.subr.mxu0 0.0
    %134 = vmatpush1.msra.mxu0 0.0
    %135 = vmatprep.subr.mxu0 0.0
    %136 = vmatpush1.msra.mxu0 0.0
    %137 = vmatprep.subr.mxu0 0.0
    %138 = vmatpush1.msra.mxu0 0.0
    %139 = vmatprep.subr.mxu0 0.0
    %140 = vmatpush1.msra.mxu0 0.0
    %141 = vmatprep.subr.mxu0 0.0
    %142 = vmatpush1.msra.mxu0 0.0
    %143 = vmatprep.subr.mxu0 0.0
    %144 = vmatpush1.msra.mxu0 0.0
    %145 = vmatprep.subr.mxu0 0.0
    %146 = vmatpush1.msra.mxu0 0.0
    %147 = vmatprep.subr.mxu0 0.0
    %148 = vmatpush1.msra.mxu0 0.0
    %149 = vmatprep.subr.mxu0 0.0
    %150 = vmatpush1.msra.mxu0 0.0
    %151 = vmatprep.subr.mxu0 0.0
    %152 = vmatpush1.msra.mxu0 0.0
    %153 = vmatprep.subr.mxu0 0.0
    %154 = vmatpush1.msra.mxu0 0.0
    %155 = vmatprep.subr.mxu0 0.0
    %156 = vmatpush1.msra.mxu0 0.0
    %157 = vmatprep.subr.mxu0 0.0
    %158 = vmatpush1.msra.mxu0 0.0
    %159 = vmatprep.subr.mxu0 0.0
    %160 = vmatpush1.msra.mxu0 0.0
    %161 = vmatprep.subr.mxu0 0.0
    %162 = vmatpush1.msra.mxu0 0.0
    %163 = vmatprep.subr.mxu0 0.0
    %164 = vmatpush1.msra.mxu0 0.0
    %165 = vmatprep.mubr.f32.mxu0 0.0
    %166 = vmatmul.mubr.f32.gmra.mrb[0].mxu0 %v78
    %v167 = vpop.f32.mrb[0].mxu0
    %v168 = vadd.f32 0.0, %v167
    %v169 = vpop.f32.mrb[0].mxu0
    %170 = vmatprep.mubr.f32.mxu0 0.0
    %171 = vmatmul.mubr.f32.gmra.mrb[0].mxu0 %v81
    %v172 = vpop.f32.mrb[0].mxu0
    %v173 = vadd.f32 0.0, %v172
    %v174 = vpop.f32.mrb[0].mxu0
    %175 = vmatprep.mubr.f32.mxu0 0.0
    %176 = vmatmul.mubr.f32.gmra.mrb[0].mxu0 %v84
    %v177 = vpop.f32.mrb[0].mxu0
    %v178 = vadd.f32 0.0, %v177
    %v179 = vpop.f32.mrb[0].mxu0
    %180 = vmatprep.mubr.f32.mxu0 0.0
    %181 = vmatmul.mubr.f32.gmra.mrb[0].mxu0 %v87
    %v182 = vpop.f32.mrb[0].mxu0
    %v183 = vadd.f32 0.0, %v182
    %v184 = vpop.f32.mrb[0].mxu0
    %185 = vmatprep.mubr.f32.mxu0 0.0
    %186 = vmatmul.mubr.f32.gmra.mrb[0].mxu0 %v90
    %v187 = vpop.f32.mrb[0].mxu0
    %v188 = vadd.f32 0.0, %v187
    %v189 = vpop.f32.mrb[0].mxu0
    %190 = vmatprep.mubr.f32.mxu0 0.0
    %191 = vmatmul.mubr.f32.gmra.mrb[0].mxu0 %v93
    %v192 = vpop.f32.mrb[0].mxu0
    %v193 = vadd.f32 0.0, %v192
    %v194 = vpop.f32.mrb[0].mxu0
    %195 = vmatprep.mubr.f32.mxu0 0.0
    %196 = vmatmul.mubr.f32.gmra.mrb[0].mxu0 %v96
    %v197 = vpop.f32.mrb[0].mxu0
    %v198 = vadd.f32 0.0, %v197
    %v199 = vpop.f32.mrb[0].mxu0
    %200 = vmatprep.mubr.f32.mxu0 0.0
    %201 = vmatmul.mubr.f32.gmra.mrb[0].mxu0 %v99
    %v202 = vpop.f32.mrb[0].mxu0
    %v203 = vadd.f32 0.0, %v202
    %v204 = vpop.f32.mrb[0].mxu0
    %205 = vdwg.mxu0
    %v206 = vadd.f32 %v47, %v168
    %v207 = vadd.f32 %v48, %v173
    %v208 = vadd.f32 %v49, %v178
    %v209 = vadd.f32 %v50, %v183
    %v210 = vadd.f32 %v51, %v188
    %v211 = vadd.f32 %v52, %v193
    %v212 = vadd.f32 %v53, %v198
    %v213 = vadd.f32 %v54, %v203
    %214 = vst [vmem:[#allocation2] sm:$0xff] %v206
    %215 = vst [vmem:[#allocation2 + $0x8] sm:$0xff] %v207
    %216 = vst [vmem:[#allocation2 + $0x10] sm:$0xff] %v208
    %217 = vst [vmem:[#allocation2 + $0x18] sm:$0xff] %v209
    %218 = vst [vmem:[#allocation2 + $0x20] sm:$0xff] %v210
    %219 = vst [vmem:[#allocation2 + $0x28] sm:$0xff] %v211
    %220 = vst [vmem:[#allocation2 + $0x30] sm:$0xff] %v212
    %221 = vst [vmem:[#allocation2 + $0x38] sm:$0xff] %v213
    // Predicated region
    $region30: #{tpu_custom_call.1} parent=1 // pred_check
      %p222 = pneg %p35
    $region31: #{tpu_custom_call.1} parent=1 // pred_check_branch
      %224 = sbr.rel (%p222) target = $region33
    $region32: #{tpu_custom_call.1} parent=1 // pred_region
      %v225 = vld [vmem:[%s1] sm:$0xff]
      %v226 = vld [vmem:[%s1 + $0x8] sm:$0xff]
      %v227 = vld [vmem:[%s1 + $0x10] sm:$0xff]
      %v228 = vld [vmem:[%s1 + $0x18] sm:$0xff]
      %v229 = vld [vmem:[%s1 + $0x20] sm:$0xff]
      %v230 = vld [vmem:[%s1 + $0x28] sm:$0xff]
      %v231 = vld [vmem:[%s1 + $0x30] sm:$0xff]
      %v232 = vld [vmem:[%s1 + $0x38] sm:$0xff]
      %v233 = vld [vmem:[%s4] sm:$0x1]
      %v234 = vld [vmem:[#allocation2] sm:$0xff]
      %v235 = vld [vmem:[#allocation2 + $0x8] sm:$0xff]
      %v236 = vld [vmem:[#allocation2 + $0x10] sm:$0xff]
      %v237 = vld [vmem:[#allocation2 + $0x18] sm:$0xff]
      %v238 = vld [vmem:[#allocation2 + $0x20] sm:$0xff]
      %v239 = vld [vmem:[#allocation2 + $0x28] sm:$0xff]
      %v240 = vld [vmem:[#allocation2 + $0x30] sm:$0xff]
      %v241 = vld [vmem:[#allocation2 + $0x38] sm:$0xff]
      %v242 = vld [vmem:[%s3] sm:$0x1]
      %v244 = vlaneseq
      %v245 = vshrl.u32 %v244, 7
      %v246 = vsub.s32 0, %v245
      %v247 = vrot.slane %v242, %v246
      %v249 = vadd.f32 %v234, %v247
      %v250 = vadd.f32 %v235, %v247
      %v251 = vadd.f32 %v236, %v247
      %v252 = vadd.f32 %v237, %v247
      %v253 = vadd.f32 %v238, %v247
      %v254 = vadd.f32 %v239, %v247
      %v255 = vadd.f32 %v240, %v247
      %v256 = vadd.f32 %v241, %v247
      %v258 = vlaneseq
      %v259 = vshrl.u32 %v258, 7
      %v260 = vsub.s32 0, %v259
      %v261 = vrot.slane %v233, %v260
      %v263 = vmul.f32 %v261, %v225
      %v264 = vmul.f32 %v261, %v226
      %v265 = vmul.f32 %v261, %v227
      %v266 = vmul.f32 %v261, %v228
      %v267 = vmul.f32 %v261, %v229
      %v268 = vmul.f32 %v261, %v230
      %v269 = vmul.f32 %v261, %v231
      %v270 = vmul.f32 %v261, %v232
      %v271 = vadd.f32 %v249, %v263
      %v272 = vadd.f32 %v250, %v264
      %v273 = vadd.f32 %v251, %v265
      %v274 = vadd.f32 %v252, %v266
      %v275 = vadd.f32 %v253, %v267
      %v276 = vadd.f32 %v254, %v268
      %v277 = vadd.f32 %v255, %v269
      %v278 = vadd.f32 %v256, %v270
      %v279 = vxor.u32 %v271, 2147483648
      %v280 = vxor.u32 %v272, 2147483648
      %v281 = vxor.u32 %v273, 2147483648
      %v282 = vxor.u32 %v274, 2147483648
      %v283 = vxor.u32 %v275, 2147483648
      %v284 = vxor.u32 %v276, 2147483648
      %v285 = vxor.u32 %v277, 2147483648
      %v286 = vxor.u32 %v278, 2147483648
      %v287 = vmul.f32 %v279, 1.442695
      %v288 = vpow.pop %v287
      %v289 = vmul.f32 %v280, 1.442695
      %v290 = vpow.pop %v289
      %v291 = vmul.f32 %v281, 1.442695
      %v292 = vpow.pop %v291
      %v293 = vmul.f32 %v282, 1.442695
      %v294 = vpow.pop %v293
      %v295 = vmul.f32 %v283, 1.442695
      %v296 = vpow.pop %v295
      %v297 = vmul.f32 %v284, 1.442695
      %v298 = vpow.pop %v297
      %v299 = vmul.f32 %v285, 1.442695
      %v300 = vpow.pop %v299
      %v301 = vmul.f32 %v286, 1.442695
      %v302 = vpow.pop %v301
      %v303 = vadd.f32 %v288, 1.0
      %v304 = vadd.f32 %v290, 1.0
      %v305 = vadd.f32 %v292, 1.0
      %v306 = vadd.f32 %v294, 1.0
      %v307 = vadd.f32 %v296, 1.0
      %v308 = vadd.f32 %v298, 1.0
      %v309 = vadd.f32 %v300, 1.0
      %v310 = vadd.f32 %v302, 1.0
      %v311 = vrcp.pop %v303
      %v312 = vmul.f32 1.0, %v311
      %v313 = vrcp.pop %v304
      %v314 = vmul.f32 1.0, %v313
      %v315 = vrcp.pop %v305
      %v316 = vmul.f32 1.0, %v315
      %v317 = vrcp.pop %v306
      %v318 = vmul.f32 1.0, %v317
      %v319 = vrcp.pop %v307
      %v320 = vmul.f32 1.0, %v319
      %v321 = vrcp.pop %v308
      %v322 = vmul.f32 1.0, %v321
      %v323 = vrcp.pop %v309
      %v324 = vmul.f32 1.0, %v323
      %v325 = vrcp.pop %v310
      %v326 = vmul.f32 1.0, %v325
      %335 = vrot.lane.b32.xlu0 %v225, 32
      %v336 = vpop.permute.xlu0 %335
      %337 = vrot.lane.b32.xlu0 %v226, 32
      %v338 = vpop.permute.xlu0 %337
      %339 = vrot.lane.b32.xlu0 %v227, 32
      %v340 = vpop.permute.xlu0 %339
      %341 = vrot.lane.b32.xlu0 %v228, 32
      %v342 = vpop.permute.xlu0 %341
      %343 = vrot.lane.b32.xlu0 %v229, 32
      %v344 = vpop.permute.xlu0 %343
      %345 = vrot.lane.b32.xlu0 %v230, 32
      %v346 = vpop.permute.xlu0 %345
      %347 = vrot.lane.b32.xlu0 %v231, 32
      %v348 = vpop.permute.xlu0 %347
      %349 = vrot.lane.b32.xlu0 %v232, 32
      %v350 = vpop.permute.xlu0 %349
      %v359 = vmul.f32 %v261, %v336
      %v360 = vmul.f32 %v261, %v338
      %v361 = vmul.f32 %v261, %v340
      %v362 = vmul.f32 %v261, %v342
      %v363 = vmul.f32 %v261, %v344
      %v364 = vmul.f32 %v261, %v346
      %v365 = vmul.f32 %v261, %v348
      %v366 = vmul.f32 %v261, %v350
      %v367 = vadd.f32 %v249, %v359
      %v368 = vadd.f32 %v250, %v360
      %v369 = vadd.f32 %v251, %v361
      %v370 = vadd.f32 %v252, %v362
      %v371 = vadd.f32 %v253, %v363
      %v372 = vadd.f32 %v254, %v364
      %v373 = vadd.f32 %v255, %v365
      %v374 = vadd.f32 %v256, %v366
      %v375 = vxor.u32 %v367, 2147483648
      %v376 = vxor.u32 %v368, 2147483648
      %v377 = vxor.u32 %v369, 2147483648
      %v378 = vxor.u32 %v370, 2147483648
      %v379 = vxor.u32 %v371, 2147483648
      %v380 = vxor.u32 %v372, 2147483648
      %v381 = vxor.u32 %v373, 2147483648
      %v382 = vxor.u32 %v374, 2147483648
      %v383 = vmul.f32 %v375, 1.442695
      %v384 = vpow.pop %v383
      %v385 = vmul.f32 %v376, 1.442695
      %v386 = vpow.pop %v385
      %v387 = vmul.f32 %v377, 1.442695
      %v388 = vpow.pop %v387
      %v389 = vmul.f32 %v378, 1.442695
      %v390 = vpow.pop %v389
      %v391 = vmul.f32 %v379, 1.442695
      %v392 = vpow.pop %v391
      %v393 = vmul.f32 %v380, 1.442695
      %v394 = vpow.pop %v393
      %v395 = vmul.f32 %v381, 1.442695
      %v396 = vpow.pop %v395
      %v397 = vmul.f32 %v382, 1.442695
      %v398 = vpow.pop %v397
      %v399 = vadd.f32 %v384, 1.0
      %v400 = vadd.f32 %v386, 1.0
      %v401 = vadd.f32 %v388, 1.0
      %v402 = vadd.f32 %v390, 1.0
      %v403 = vadd.f32 %v392, 1.0
      %v404 = vadd.f32 %v394, 1.0
      %v405 = vadd.f32 %v396, 1.0
      %v406 = vadd.f32 %v398, 1.0
      %v407 = vrcp.pop %v399
      %v408 = vmul.f32 1.0, %v407
      %v409 = vrcp.pop %v400
      %v410 = vmul.f32 1.0, %v409
      %v411 = vrcp.pop %v401
      %v412 = vmul.f32 1.0, %v411
      %v413 = vrcp.pop %v402
      %v414 = vmul.f32 1.0, %v413
      %v415 = vrcp.pop %v403
      %v416 = vmul.f32 1.0, %v415
      %v417 = vrcp.pop %v404
      %v418 = vmul.f32 1.0, %v417
      %v419 = vrcp.pop %v405
      %v420 = vmul.f32 1.0, %v419
      %v421 = vrcp.pop %v406
      %v422 = vmul.f32 1.0, %v421
      %v423 = vmul.f32 %v408, %v336
      %v424 = vmul.f32 %v410, %v338
      %v425 = vmul.f32 %v412, %v340
      %v426 = vmul.f32 %v414, %v342
      %v427 = vmul.f32 %v416, %v344
      %v428 = vmul.f32 %v418, %v346
      %v429 = vmul.f32 %v420, %v348
      %v430 = vmul.f32 %v422, %v350
      %v431 = vtanh.pop %v249
      %v432 = vtanh.pop %v250
      %v433 = vtanh.pop %v251
      %v434 = vtanh.pop %v252
      %v435 = vtanh.pop %v253
      %v436 = vtanh.pop %v254
      %v437 = vtanh.pop %v255
      %v438 = vtanh.pop %v256
      %447 = vrot.lane.b32.xlu0 %v431, 64
      %v448 = vpop.permute.xlu0 %447
      %449 = vrot.lane.b32.xlu0 %v432, 64
      %v450 = vpop.permute.xlu0 %449
      %451 = vrot.lane.b32.xlu0 %v433, 64
      %v452 = vpop.permute.xlu0 %451
      %453 = vrot.lane.b32.xlu0 %v434, 64
      %v454 = vpop.permute.xlu0 %453
      %455 = vrot.lane.b32.xlu0 %v435, 64
      %v456 = vpop.permute.xlu0 %455
      %457 = vrot.lane.b32.xlu0 %v436, 64
      %v458 = vpop.permute.xlu0 %457
      %459 = vrot.lane.b32.xlu0 %v437, 64
      %v460 = vpop.permute.xlu0 %459
      %461 = vrot.lane.b32.xlu0 %v438, 64
      %v462 = vpop.permute.xlu0 %461
      %v471 = vmul.f32 %v312, %v448
      %v472 = vmul.f32 %v314, %v450
      %v473 = vmul.f32 %v316, %v452
      %v474 = vmul.f32 %v318, %v454
      %v475 = vmul.f32 %v320, %v456
      %v476 = vmul.f32 %v322, %v458
      %v477 = vmul.f32 %v324, %v460
      %v478 = vmul.f32 %v326, %v462
      %487 = vrot.lane.b32.xlu0 %v471, 32
      %v488 = vpop.permute.xlu0 %487
      %489 = vrot.lane.b32.xlu0 %v472, 32
      %v490 = vpop.permute.xlu0 %489
      %491 = vrot.lane.b32.xlu0 %v473, 32
      %v492 = vpop.permute.xlu0 %491
      %493 = vrot.lane.b32.xlu0 %v474, 32
      %v494 = vpop.permute.xlu0 %493
      %495 = vrot.lane.b32.xlu0 %v475, 32
      %v496 = vpop.permute.xlu0 %495
      %497 = vrot.lane.b32.xlu0 %v476, 32
      %v498 = vpop.permute.xlu0 %497
      %499 = vrot.lane.b32.xlu0 %v477, 32
      %v500 = vpop.permute.xlu0 %499
      %501 = vrot.lane.b32.xlu0 %v478, 32
      %v502 = vpop.permute.xlu0 %501
      %v511 = vadd.f32 %v423, %v488
      %v512 = vadd.f32 %v424, %v490
      %v513 = vadd.f32 %v425, %v492
      %v514 = vadd.f32 %v426, %v494
      %v515 = vadd.f32 %v427, %v496
      %v516 = vadd.f32 %v428, %v498
      %v517 = vadd.f32 %v429, %v500
      %v518 = vadd.f32 %v430, %v502
      %527 = vrot.lane.b32.xlu0 %v511, 64
      %v528 = vpop.permute.xlu0 %527
      %529 = vrot.lane.b32.xlu0 %v512, 64
      %v530 = vpop.permute.xlu0 %529
      %531 = vrot.lane.b32.xlu0 %v513, 64
      %v532 = vpop.permute.xlu0 %531
      %533 = vrot.lane.b32.xlu0 %v514, 64
      %v534 = vpop.permute.xlu0 %533
      %535 = vrot.lane.b32.xlu0 %v515, 64
      %v536 = vpop.permute.xlu0 %535
      %537 = vrot.lane.b32.xlu0 %v516, 64
      %v538 = vpop.permute.xlu0 %537
      %539 = vrot.lane.b32.xlu0 %v517, 64
      %v540 = vpop.permute.xlu0 %539
      %541 = vrot.lane.b32.xlu0 %v518, 64
      %v542 = vpop.permute.xlu0 %541
      %v551 = vmul.f32 %v261, %v528
      %v552 = vmul.f32 %v261, %v530
      %v553 = vmul.f32 %v261, %v532
      %v554 = vmul.f32 %v261, %v534
      %v555 = vmul.f32 %v261, %v536
      %v556 = vmul.f32 %v261, %v538
      %v557 = vmul.f32 %v261, %v540
      %v558 = vmul.f32 %v261, %v542
      %v559 = vadd.f32 %v249, %v551
      %v560 = vadd.f32 %v250, %v552
      %v561 = vadd.f32 %v251, %v553
      %v562 = vadd.f32 %v252, %v554
      %v563 = vadd.f32 %v253, %v555
      %v564 = vadd.f32 %v254, %v556
      %v565 = vadd.f32 %v255, %v557
      %v566 = vadd.f32 %v256, %v558
      %v567 = vxor.u32 %v559, 2147483648
      %v568 = vxor.u32 %v560, 2147483648
      %v569 = vxor.u32 %v561, 2147483648
      %v570 = vxor.u32 %v562, 2147483648
      %v571 = vxor.u32 %v563, 2147483648
      %v572 = vxor.u32 %v564, 2147483648
      %v573 = vxor.u32 %v565, 2147483648
      %v574 = vxor.u32 %v566, 2147483648
      %v575 = vmul.f32 %v567, 1.442695
      %v576 = vpow.pop %v575
      %v577 = vmul.f32 %v568, 1.442695
      %v578 = vpow.pop %v577
      %v579 = vmul.f32 %v569, 1.442695
      %v580 = vpow.pop %v579
      %v581 = vmul.f32 %v570, 1.442695
      %v582 = vpow.pop %v581
      %v583 = vmul.f32 %v571, 1.442695
      %v584 = vpow.pop %v583
      %v585 = vmul.f32 %v572, 1.442695
      %v586 = vpow.pop %v585
      %v587 = vmul.f32 %v573, 1.442695
      %v588 = vpow.pop %v587
      %v589 = vmul.f32 %v574, 1.442695
      %v590 = vpow.pop %v589
      %v591 = vadd.f32 %v576, 1.0
      %v592 = vadd.f32 %v578, 1.0
      %v593 = vadd.f32 %v580, 1.0
      %v594 = vadd.f32 %v582, 1.0
      %v595 = vadd.f32 %v584, 1.0
      %v596 = vadd.f32 %v586, 1.0
      %v597 = vadd.f32 %v588, 1.0
      %v598 = vadd.f32 %v590, 1.0
      %v599 = vrcp.pop %v591
      %v600 = vmul.f32 1.0, %v599
      %v601 = vrcp.pop %v592
      %v602 = vmul.f32 1.0, %v601
      %v603 = vrcp.pop %v593
      %v604 = vmul.f32 1.0, %v603
      %v605 = vrcp.pop %v594
      %v606 = vmul.f32 1.0, %v605
      %v607 = vrcp.pop %v595
      %v608 = vmul.f32 1.0, %v607
      %v609 = vrcp.pop %v596
      %v610 = vmul.f32 1.0, %v609
      %v611 = vrcp.pop %v597
      %v612 = vmul.f32 1.0, %v611
      %v613 = vrcp.pop %v598
      %v614 = vmul.f32 1.0, %v613
      %v615 = vtanh.pop %v511
      %v616 = vtanh.pop %v512
      %v617 = vtanh.pop %v513
      %v618 = vtanh.pop %v514
      %v619 = vtanh.pop %v515
      %v620 = vtanh.pop %v516
      %v621 = vtanh.pop %v517
      %v622 = vtanh.pop %v518
      %631 = vrot.lane.b32.xlu0 %v615, 64
      %v632 = vpop.permute.xlu0 %631
      %633 = vrot.lane.b32.xlu0 %v616, 64
      %v634 = vpop.permute.xlu0 %633
      %635 = vrot.lane.b32.xlu0 %v617, 64
      %v636 = vpop.permute.xlu0 %635
      %637 = vrot.lane.b32.xlu0 %v618, 64
      %v638 = vpop.permute.xlu0 %637
      %639 = vrot.lane.b32.xlu0 %v619, 64
      %v640 = vpop.permute.xlu0 %639
      %641 = vrot.lane.b32.xlu0 %v620, 64
      %v642 = vpop.permute.xlu0 %641
      %643 = vrot.lane.b32.xlu0 %v621, 64
      %v644 = vpop.permute.xlu0 %643
      %645 = vrot.lane.b32.xlu0 %v622, 64
      %v646 = vpop.permute.xlu0 %645
      %v655 = vmul.f32 %v600, %v632
      %v656 = vmul.f32 %v602, %v634
      %v657 = vmul.f32 %v604, %v636
      %v658 = vmul.f32 %v606, %v638
      %v659 = vmul.f32 %v608, %v640
      %v660 = vmul.f32 %v610, %v642
      %v661 = vmul.f32 %v612, %v644
      %v662 = vmul.f32 %v614, %v646
      %671 = vrot.lane.b32.xlu0 %v655, 32
      %v672 = vpop.permute.xlu0 %671
      %673 = vrot.lane.b32.xlu0 %v656, 32
      %v674 = vpop.permute.xlu0 %673
      %675 = vrot.lane.b32.xlu0 %v657, 32
      %v676 = vpop.permute.xlu0 %675
      %677 = vrot.lane.b32.xlu0 %v658, 32
      %v678 = vpop.permute.xlu0 %677
      %679 = vrot.lane.b32.xlu0 %v659, 32
      %v680 = vpop.permute.xlu0 %679
      %681 = vrot.lane.b32.xlu0 %v660, 32
      %v682 = vpop.permute.xlu0 %681
      %683 = vrot.lane.b32.xlu0 %v661, 32
      %v684 = vpop.permute.xlu0 %683
      %685 = vrot.lane.b32.xlu0 %v662, 32
      %v686 = vpop.permute.xlu0 %685
      %vm695 = vcmask 261120
      %v696 = vsel %vm695, %v672, %v511
      %v697 = vsel %vm695, %v674, %v512
      %v698 = vsel %vm695, %v676, %v513
      %v699 = vsel %vm695, %v678, %v514
      %v700 = vsel %vm695, %v680, %v515
      %v701 = vsel %vm695, %v682, %v516
      %v702 = vsel %vm695, %v684, %v517
      %v703 = vsel %vm695, %v686, %v518
      %vm704 = vcmask 523264
      %705 = vst.msk [vmem:[#allocation6] sm:$0xff] %vm704, %v696
      %706 = vst.msk [vmem:[#allocation6 + $0x8] sm:$0xff] %vm704, %v697
      %707 = vst.msk [vmem:[#allocation6 + $0x10] sm:$0xff] %vm704, %v698
      %708 = vst.msk [vmem:[#allocation6 + $0x18] sm:$0xff] %vm704, %v699
      %709 = vst.msk [vmem:[#allocation6 + $0x20] sm:$0xff] %vm704, %v700
      %710 = vst.msk [vmem:[#allocation6 + $0x28] sm:$0xff] %vm704, %v701
      %711 = vst.msk [vmem:[#allocation6 + $0x30] sm:$0xff] %vm704, %v702
      %712 = vst.msk [vmem:[#allocation6 + $0x38] sm:$0xff] %vm704, %v703
    $region33: #{tpu_custom_call.1} parent=1 // pred_fallthru
      _
    // Predicated region
    $region34: #{tpu_custom_call.1} parent=1 // pred_check
      _
    $region35: #{tpu_custom_call.1} parent=1 // pred_check_branch
      %714 = sbr.rel (0) target = $region37
    $region36: #{tpu_custom_call.1} parent=1 // pred_region
      %s716 = ssub.s32 1024, 1024
      %717 = vsyncadd [#allocation5], %s716
      %s718 = sshll.u32 [#allocation6], 4
      %s719 = int_to_ptr.vmem [resolvable:$true] %s718
      %724 = dma.vmem_to_hbm [thread:$0]  %s719, 1024, %s5, [#allocation5], 128, 128, 8
    $region37: #{tpu_custom_call.1} parent=1 // pred_fallthru
      _
    // Predicated region
    $region38: #{tpu_custom_call.1} parent=1 // pred_check
      _
    $region39: #{tpu_custom_call.1} parent=1 // pred_check_branch
      %726 = sbr.rel (0) target = $region41
    $region40: #{tpu_custom_call.1} parent=1 // pred_region
      %727 = dma.done [#allocation5], 1024
    $region41: #{tpu_custom_call.1} parent=1 // pred_fallthru
      _
    %728 = vsyncpa [#allocation4], 1
    %729 = vsyncpa [#allocation5], 1

</llo_original>
